<compile_context>
chip_gen: v7x
topology: tpu7x:2x2x1
jax: 0.10.0
libtpu: 0.0.40
codegen_flags: <defaults>
</compile_context>

<pallas_src>
import functools
import math

import jax
import jax.numpy as jnp
import numpy as np
from jax.experimental import pallas as pl
from jax.experimental.pallas import tpu as pltpu


# ----------------------------------------------------------------------------
# Basis construction (host-side, float64 for accuracy)
# ----------------------------------------------------------------------------
def _idct_basis_np(N: int, norm: str = "ortho") -> np.ndarray:
    """B[k, n] such that idct(X)[..., n] = sum_k X[..., k] * B[k, n] (torch-dct semantics)."""
    k = np.arange(N, dtype=np.float64)[:, None]
    n = np.arange(N, dtype=np.float64)[None, :]
    cos = np.cos(np.pi * (2.0 * n + 1.0) * k / (2.0 * N))
    if norm == "ortho":
        w = np.where(k == 0, np.sqrt(1.0 / N), np.sqrt(2.0 / N))
    else:
        # torch-dct idct(norm=None): x[n] = (1/N) * (X[0]/2 + sum_{k>0} X[k] cos(...));
        # the 1/N comes from the ifft in the fft-based implementation.
        w = np.where(k == 0, 0.5 / N, 1.0 / N)
    return w * cos


def _round_up(x: int, m: int) -> int:
    return ((x + m - 1) // m) * m


# ----------------------------------------------------------------------------
# Kron path: one (tile, H*W) @ (H*W, hw_out) matmul per grid step (lane-dense output)
# ----------------------------------------------------------------------------
def _idct2d_kron_kernel(k_ref, x_ref, o_ref):
    # Basis is pre-cast host-side; no per-step cast on the VPU.
    y = jnp.dot(x_ref[...], k_ref[...], preferred_element_type=jnp.float32)
    o_ref[...] = y.astype(o_ref.dtype)


def _idct2d_kron(xf, kmat, *, tile):
    bc, hw = xf.shape
    hw_out = kmat.shape[1]
    itemsize = np.dtype(xf.dtype).itemsize
    grid = (pl.cdiv(bc, tile),)
    flops = 2 * bc * hw * hw_out
    bytes_accessed = (
        bc * hw * itemsize
        + bc * hw_out * itemsize
        + kmat.size * np.dtype(kmat.dtype).itemsize
    )
    return pl.pallas_call(
        _idct2d_kron_kernel,
        out_shape=jax.ShapeDtypeStruct((bc, hw_out), xf.dtype),
        grid_spec=pltpu.PrefetchScalarGridSpec(
            num_scalar_prefetch=0,
            grid=grid,
            in_specs=[
                # Grid-invariant kron(Bh, Bw); stays VMEM-resident across steps.
                # TODO(synk): pl.Buffered(1) would drop its second buffer; kept default
                # to avoid relying on pipeline_mode support for the main grid pipeline.
                pl.BlockSpec((hw, hw_out), lambda i: (0, 0)),
                pl.BlockSpec((tile, hw), lambda i: (i, 0)),        # input slab
            ],
            out_specs=pl.BlockSpec((tile, hw_out), lambda i: (i, 0)),  # lane-dense output
        ),
        compiler_params=pltpu.CompilerParams(
            dimension_semantics=("parallel",),
            vmem_limit_bytes=40 * 1024 * 1024,
        ),
        cost_estimate=pl.CostEstimate(
            flops=int(flops), transcendentals=0, bytes_accessed=int(bytes_accessed)
        ),
    )(kmat, xf)


# ----------------------------------------------------------------------------
# Separable fallback for large spatial dims
# ----------------------------------------------------------------------------
def _idct2d_sep_kernel(bht_ref, bw_ref, x_ref, o_ref, *, tile, H, W):
    bht = bht_ref[...]          # (H, H) f32 = Bh^T  (bht[n, h] = Bh[h, n])
    bw = bw_ref[...]            # (W, W) f32
    x = x_ref[...]              # (tile, H, W)
    # W-axis pass: fold the batch into M so the MXU runs full height; accumulate in f32
    # and keep the intermediate in f32 (no cast round-trip between the two passes).
    t = jnp.dot(x.reshape(tile * H, W), bw, preferred_element_type=jnp.float32)
    t = t.reshape(tile, H, W)
    # H-axis pass: batched contraction over the tile axis (replaces the per-slice
    # Python loop; Mosaic pipelines the stores of the whole block).
    bht_b = jnp.broadcast_to(bht, (tile, H, H))
    y = jnp.einsum("bnh,bhw->bnw", bht_b, t, preferred_element_type=jnp.float32)
    o_ref[...] = y.astype(o_ref.dtype)


def _idct2d_separable(xf, bht, bw, *, tile, H, W):
    bc = xf.shape[0]
    itemsize = np.dtype(xf.dtype).itemsize
    grid = (pl.cdiv(bc, tile),)
    flops = 2 * bc * (H * W * W + H * H * W)
    bytes_accessed = 2 * bc * H * W * itemsize + (H * H + W * W) * 4
    return pl.pallas_call(
        functools.partial(_idct2d_sep_kernel, tile=tile, H=H, W=W),
        out_shape=jax.ShapeDtypeStruct((bc, H, W), xf.dtype),
        grid_spec=pltpu.PrefetchScalarGridSpec(
            num_scalar_prefetch=0,
            grid=grid,
            in_specs=[
                pl.BlockSpec((H, H), lambda i: (0, 0)),
                pl.BlockSpec((W, W), lambda i: (0, 0)),
                pl.BlockSpec((tile, H, W), lambda i: (i, 0, 0)),
            ],
            out_specs=pl.BlockSpec((tile, H, W), lambda i: (i, 0, 0)),
        ),
        compiler_params=pltpu.CompilerParams(
            dimension_semantics=("parallel",),
            vmem_limit_bytes=40 * 1024 * 1024,
        ),
        cost_estimate=pl.CostEstimate(
            flops=int(flops), transcendentals=0, bytes_accessed=int(bytes_accessed)
        ),
    )(bht, bw, xf)


# ----------------------------------------------------------------------------
# Public wrapper (Idct.forward)
# ----------------------------------------------------------------------------
def idct_2d_pallas(x: jnp.ndarray, norm: str = "ortho", force_separable: bool = False):
    """2D IDCT over the last two dims of an NCHW tensor (== Idct(norm).forward)."""
    B, C, H, W = x.shape
    BC = B * C
    hw = H * W
    itemsize = np.dtype(x.dtype).itemsize
    is_bf16 = x.dtype == jnp.bfloat16

    bh = _idct_basis_np(H, norm)  # (H, H) float64
    bw = _idct_basis_np(W, norm)  # (W, W) float64

    # Dtype-aware threshold: kron inflates FLOPs by hw/(H+W); keep the single-matmul
    # path only while it stays HBM-bound (f32 MXU tolerates less than bf16, esp. v5e).
    kron_max = 1024 if is_bf16 else 512

    if hw <= kron_max and not force_separable:
        # --- Kronecker single-matmul path (lane-dense output slabs) ---
        hw_out = _round_up(hw, 128)  # lane-dense stores for odd block sizes
        kmat_np = np.kron(bh, bw)    # (hw, hw)
        if hw_out != hw:
            kmat_np = np.pad(kmat_np, ((0, 0), (0, hw_out - hw)))
        # Basis pre-cast to the compute dtype host-side (bf16 only when the input is
        # bf16; at hw <= 1024 the f32 accumulation keeps the error small).
        basis_dtype = jnp.bfloat16 if is_bf16 else jnp.float32
        kmat = jnp.asarray(kmat_np, dtype=basis_dtype)

        # ~4 MiB input slab per grid step (near the measured 85%-of-roofline block
        # size, amortizes ~0.35 us/step overhead).  Multiple of 8 rows; keep the grid
        # >= 2 steps when the batch allows (v7x has 2 TensorCores); with double
        # buffering, 2*(in+out) + kmat stays well under v7x's 64 MiB VMEM.
        tile = (4 << 20) // max(hw * itemsize, 1)
        tile = max(8, min(1024, (tile // 8) * 8))
        tile = min(tile, max(8, _round_up((BC + 1) // 2, 8)))

        # No jnp.pad / slice round-trip: ragged last block is masked by Pallas.
        xf = x.reshape(BC, hw)
        out = _idct2d_kron(xf, kmat, tile=tile)
        if hw_out != hw:
            out = out[:, :hw]
        return out.reshape(B, C, H, W)

    # --- separable fallback for large spatial dims ---
    # Bases kept in f32 (tiny, and keeps the second pass accurate for bf16 inputs).
    # TODO(synk): very large H/W (single slice > several MiB) would additionally need
    # spatial tiling of the (H, W) plane; not implemented here.
    bht = jnp.asarray(bh.T, dtype=jnp.float32)  # (H, H) = Bh^T
    bwj = jnp.asarray(bw, dtype=jnp.float32)    # (W, W)
    slice_bytes = H * W * itemsize
    tile = int(max(1, min(64, (4 << 20) // max(slice_bytes, 1))))
    tile = min(tile, BC)
    xf = x.reshape(BC, H, W)                    # no padding; ragged last block masked
    out = _idct2d_separable(xf, bht, bwj, tile=tile, H=H, W=W)
    return out.reshape(B, C, H, W)


# ----------------------------------------------------------------------------
# Pure-JAX reference mirroring the torch-dct (fft based) implementation
# ----------------------------------------------------------------------------
def _idct_ref(X, norm="ortho"):
    X_shape = X.shape
    N = X_shape[-1]
    X_v = X.reshape(-1, N) / 2
    if norm == "ortho":
        X_v = X_v.at[:, 0].multiply(np.sqrt(N) * 2)
        X_v = X_v.at[:, 1:].multiply(np.sqrt(N / 2) * 2)
    k = jnp.arange(N, dtype=X.dtype)[None, :] * np.pi / (2 * N)
    W_r = jnp.cos(k)
    W_i = jnp.sin(k)
    V_t_r = X_v
    V_t_i = jnp.concatenate([X_v[:, :1] * 0, -X_v[:, ::-1][:, :-1]], axis=1)
    V_r = V_t_r * W_r - V_t_i * W_i
    V_i = V_t_r * W_i + V_t_i * W_r
    V = V_r + 1j * V_i
    v = jnp.fft.ifft(V, axis=1).real
    idx1 = np.arange(math.ceil(N / 2))
    idx2 = np.arange(N - 1, N // 2 - 1, -1)
    n = N if N % 2 == 0 else N + 1
    idx = np.stack([idx1, idx2], axis=1).reshape(n)[:N]
    xo = v[:, idx]
    return xo.reshape(X_shape).astype(X.dtype)


def _idct_2d_ref(X, norm="ortho"):
    x1 = _idct_ref(X, norm=norm)
    x2 = _idct_ref(jnp.swapaxes(x1, -1, -2), norm=norm)
    return jnp.swapaxes(x2, -1, -2)


# ----------------------------------------------------------------------------
if __name__ == "__main__":
    key = jax.random.PRNGKey(0)
    B, C, H, W = 2, 4, 16, 16
    x = jax.random.normal(key, (B, C, H, W), dtype=jnp.float32)

    ref = jax.block_until_ready(_idct_2d_ref(x, norm="ortho"))

    # Primary (Kronecker single-matmul) path -- used for this shape.
    out = jax.block_until_ready(idct_2d_pallas(x, norm="ortho"))
    assert out.shape == x.shape and out.dtype == x.dtype
    np.testing.assert_allclose(np.asarray(out), np.asarray(ref), rtol=1e-4, atol=1e-4)

    # Separable fallback path (used for large H, W) -- exercised here too.
    out2 = jax.block_until_ready(idct_2d_pallas(x, norm="ortho", force_separable=True))
    np.testing.assert_allclose(np.asarray(out2), np.asarray(ref), rtol=1e-4, atol=1e-4)

    # norm=None path (scaling fixed to match the fft-based reference).
    ref_n = jax.block_until_ready(_idct_2d_ref(x, norm=None))
    out_n = jax.block_until_ready(idct_2d_pallas(x, norm=None))
    np.testing.assert_allclose(np.asarray(out_n), np.asarray(ref_n), rtol=1e-4, atol=1e-5)

    print("KERNEL_OK")
</pallas_src>

<mosaic_0001>
module attributes {stable_mosaic.version = 11 : i64} {
  func.func @_idct2d_kron_kernel(%arg0: i32, %arg1: memref<256x256xf32, #tpu.memory_space<vmem>>, %arg2: memref<8x256xf32, #tpu.memory_space<vmem>>, %arg3: memref<8x256xf32, #tpu.memory_space<vmem>>) attributes {dimension_semantics = [#tpu.dimension_semantics<parallel>], iteration_bounds = array<i64: 1>, scalar_prefetch = 0 : i64, scratch_operands = 0 : i64, tpu.core_type = #tpu.core_type<tc>, window_params = [{pipeline_mode = #tpu.pipeline_mode<synchronous>, transform_indices = @transform_0, window_bounds = array<i64: 256, 256>}, {transform_indices = @transform_1, window_bounds = array<i64: 8, 256>}, {transform_indices = @transform_2, window_bounds = array<i64: 8, 256>}]} {
    %c0 = arith.constant 0 : index
    %c0_0 = arith.constant 0 : index
    %0 = vector.load %arg2[%c0, %c0_0] : memref<8x256xf32, #tpu.memory_space<vmem>>, vector<8x256xf32>
    %c0_1 = arith.constant 0 : index
    %c0_2 = arith.constant 0 : index
    %1 = vector.load %arg1[%c0_1, %c0_2] : memref<256x256xf32, #tpu.memory_space<vmem>>, vector<256x256xf32>
    %cst = arith.constant dense<0.000000e+00> : vector<8x256xf32>
    %2 = tpu.matmul %0, %1, %cst {dimension_numbers = #tpu.dot_dimension_numbers<[1], [0], [0], [1], [0, 0, 1, 1], [], []>} : vector<8x256xf32>, vector<256x256xf32>, vector<8x256xf32> -> vector<8x256xf32>
    %c0_3 = arith.constant 0 : index
    %c0_4 = arith.constant 0 : index
    %3 = vector.load %arg3[%c0_3, %c0_4] : memref<8x256xf32, #tpu.memory_space<vmem>>, vector<8x256xf32>
    tpu.vector_store %arg3[%c0_3, %c0_4], %2 {strides = array<i32>} : memref<8x256xf32, #tpu.memory_space<vmem>>, vector<8x256xf32>,
    return
  }
  func.func @transform_0(%arg0: i32) -> (i32, i32) {
    %c0_i32 = arith.constant 0 : i32
    %c0_i32_0 = arith.constant 0 : i32
    %c0_i32_1 = arith.constant 0 : i32
    return %c0_i32, %c0_i32_0 : i32, i32
  }
  func.func @transform_1(%arg0: i32) -> (i32, i32) {
    %c0_i32 = arith.constant 0 : i32
    %c0_i32_0 = arith.constant 0 : i32
    return %arg0, %c0_i32 : i32, i32
  }
  func.func @transform_2(%arg0: i32) -> (i32, i32) {
    %c0_i32 = arith.constant 0 : i32
    %c0_i32_0 = arith.constant 0 : i32
    return %arg0, %c0_i32 : i32, i32
  }
}

</mosaic_0001>

<llo_original>
// kernel: tpu_custom_call.1
$region0: #{tpu_custom_call.1}
  #allocation0 [shape = 'u32[]', space=smem, size = 0x4, offset = 0x4, fixed_abs, tag = 'smem constant byte address 0x4 - core index']
  #allocation1 [shape = 'u32[144,128]{1,0:T(1,128)}', space=vmem, size = 0x12000, scoped, tag = 'internal scratch']
  %s0 = inlined_call_operand.hbm [shape: f32[256,256], index: 0, kind: input, shape index: {}]
  %s1 = inlined_call_operand.hbm [shape: f32[8,256], index: 1, kind: input, shape index: {}]
  %s2 = inlined_call_operand.hbm [shape: f32[8,256], index: 2, kind: output, shape index: {}]
  %s3 = sld [smem:[#allocation0]]
  $region26: #{tpu_custom_call.1} parent=0
    _
  %s5 = ssub.s32 1, %s3
  %s6 = scalar_select 0, %s5, %s3
  $region1: #{tpu_custom_call.1} parent=0
    #allocation2 [shape = 'u8[262144]{0}', space=vmem, size = 0x40000, scoped, tag = 'input window, operand 0, single buffered']
    #allocation3 [shape = 's32[1]{0}', space=sflag, size = 0x4, scoped, tag = 'scoped memory for tpu_custom_call.1']
    #allocation4 [shape = 's32[1]{0}', space=sflag, size = 0x4, scoped, tag = 'scoped memory for tpu_custom_call.1']
    #allocation5 [shape = 'u8[8192]{0}', space=vmem, size = 0x2000, scoped, tag = 'input window, operand 1, single buffered']
    #allocation6 [shape = 's32[1]{0}', space=sflag, size = 0x4, scoped, tag = 'scoped memory for tpu_custom_call.1']
    #allocation7 [shape = 'u8[8192]{0}', space=vmem, size = 0x2000, scoped, tag = 'output window, operand 0, single buffered']
    %7 = vsyncpa [#allocation3], 0
    %8 = vsyncpa [#allocation6], 0
    %9 = vsyncpa [#allocation4], 0
    // Predicated region
    $region2: #{tpu_custom_call.1} parent=1 // pred_check
      _
    $region3: #{tpu_custom_call.1} parent=1 // pred_check_branch
      %11 = sbr.rel (0) target = $region5
    $region4: #{tpu_custom_call.1} parent=1 // pred_region
      %s13 = ssub.s32 8192, 8192
      %14 = vsyncadd [#allocation3], %s13
      %s15 = sshll.u32 [#allocation2], 4
      %s16 = int_to_ptr.vmem [resolvable:$true] %s15
      %21 = dma.hbm_to_vmem [thread:$0]  %s0, 8192, %s16, [#allocation3], 256, 256, 16
    $region5: #{tpu_custom_call.1} parent=1 // pred_fallthru
      _
    // Predicated region
    $region6: #{tpu_custom_call.1} parent=1 // pred_check
      _
    $region7: #{tpu_custom_call.1} parent=1 // pred_check_branch
      %23 = sbr.rel (0) target = $region9
    $region8: #{tpu_custom_call.1} parent=1 // pred_region
      %s25 = ssub.s32 256, 256
      %26 = vsyncadd [#allocation6], %s25
      %s28 = sshll.u32 [#allocation5], 4
      %s29 = int_to_ptr.vmem [resolvable:$true] %s28
      %31 = dma.hbm_to_vmem [thread:$0]  %s1, 256, %s29, [#allocation6]
    $region9: #{tpu_custom_call.1} parent=1 // pred_fallthru
      _
    // Predicated region
    $region10: #{tpu_custom_call.1} parent=1 // pred_check
      _
    $region11: #{tpu_custom_call.1} parent=1 // pred_check_branch
      %33 = sbr.rel (0) target = $region13
    $region12: #{tpu_custom_call.1} parent=1 // pred_region
      %34 = dma.done [#allocation3], 8192
    $region13: #{tpu_custom_call.1} parent=1 // pred_fallthru
      _
    // Predicated region
    $region14: #{tpu_custom_call.1} parent=1 // pred_check
      _
    $region15: #{tpu_custom_call.1} parent=1 // pred_check_branch
      %36 = sbr.rel (0) target = $region17
    $region16: #{tpu_custom_call.1} parent=1 // pred_region
      %37 = dma.done [#allocation6], 256
    $region17: #{tpu_custom_call.1} parent=1 // pred_fallthru
      _
    %v38 = vld [vmem:[#allocation5] sm:$0xff]
    %v39 = vld [vmem:[#allocation5 + $0x8] sm:$0xff]
    %v40 = vld [vmem:[#allocation2] sm:$0xff]
    %v41 = vld [vmem:[#allocation2 + $0x8] sm:$0xff]
    %v42 = vld [vmem:[#allocation2 + $0x10] sm:$0xff]
    %v43 = vld [vmem:[#allocation2 + $0x18] sm:$0xff]
    %v44 = vld [vmem:[#allocation2 + $0x20] sm:$0xff]
    %v45 = vld [vmem:[#allocation2 + $0x28] sm:$0xff]
    %v46 = vld [vmem:[#allocation2 + $0x30] sm:$0xff]
    %v47 = vld [vmem:[#allocation2 + $0x38] sm:$0xff]
    %v48 = vld [vmem:[#allocation2 + $0x40] sm:$0xff]
    %v49 = vld [vmem:[#allocation2 + $0x48] sm:$0xff]
    %v50 = vld [vmem:[#allocation2 + $0x50] sm:$0xff]
    %v51 = vld [vmem:[#allocation2 + $0x58] sm:$0xff]
    %v52 = vld [vmem:[#allocation2 + $0x60] sm:$0xff]
    %v53 = vld [vmem:[#allocation2 + $0x68] sm:$0xff]
    %v54 = vld [vmem:[#allocation2 + $0x70] sm:$0xff]
    %v55 = vld [vmem:[#allocation2 + $0x78] sm:$0xff]
    %v56 = vld [vmem:[#allocation2 + $0x80] sm:$0xff]
    %v57 = vld [vmem:[#allocation2 + $0x88] sm:$0xff]
    %v58 = vld [vmem:[#allocation2 + $0x90] sm:$0xff]
    %v59 = vld [vmem:[#allocation2 + $0x98] sm:$0xff]
    %v60 = vld [vmem:[#allocation2 + $0xa0] sm:$0xff]
    %v61 = vld [vmem:[#allocation2 + $0xa8] sm:$0xff]
    %v62 = vld [vmem:[#allocation2 + $0xb0] sm:$0xff]
    %v63 = vld [vmem:[#allocation2 + $0xb8] sm:$0xff]
    %v64 = vld [vmem:[#allocation2 + $0xc0] sm:$0xff]
    %v65 = vld [vmem:[#allocation2 + $0xc8] sm:$0xff]
    %v66 = vld [vmem:[#allocation2 + $0xd0] sm:$0xff]
    %v67 = vld [vmem:[#allocation2 + $0xd8] sm:$0xff]
    %v68 = vld [vmem:[#allocation2 + $0xe0] sm:$0xff]
    %v69 = vld [vmem:[#allocation2 + $0xe8] sm:$0xff]
    %v70 = vld [vmem:[#allocation2 + $0xf0] sm:$0xff]
    %v71 = vld [vmem:[#allocation2 + $0xf8] sm:$0xff]
    %v72 = vld [vmem:[#allocation2 + $0x100] sm:$0xff]
    %v73 = vld [vmem:[#allocation2 + $0x108] sm:$0xff]
    %v74 = vld [vmem:[#allocation2 + $0x110] sm:$0xff]
    %v75 = vld [vmem:[#allocation2 + $0x118] sm:$0xff]
    %v76 = vld [vmem:[#allocation2 + $0x120] sm:$0xff]
    %v77 = vld [vmem:[#allocation2 + $0x128] sm:$0xff]
    %v78 = vld [vmem:[#allocation2 + $0x130] sm:$0xff]
    %v79 = vld [vmem:[#allocation2 + $0x138] sm:$0xff]
    %v80 = vld [vmem:[#allocation2 + $0x140] sm:$0xff]
    %v81 = vld [vmem:[#allocation2 + $0x148] sm:$0xff]
    %v82 = vld [vmem:[#allocation2 + $0x150] sm:$0xff]
    %v83 = vld [vmem:[#allocation2 + $0x158] sm:$0xff]
    %v84 = vld [vmem:[#allocation2 + $0x160] sm:$0xff]
    %v85 = vld [vmem:[#allocation2 + $0x168] sm:$0xff]
    %v86 = vld [vmem:[#allocation2 + $0x170] sm:$0xff]
    %v87 = vld [vmem:[#allocation2 + $0x178] sm:$0xff]
    %v88 = vld [vmem:[#allocation2 + $0x180] sm:$0xff]
    %v89 = vld [vmem:[#allocation2 + $0x188] sm:$0xff]
    %v90 = vld [vmem:[#allocation2 + $0x190] sm:$0xff]
    %v91 = vld [vmem:[#allocation2 + $0x198] sm:$0xff]
    %v92 = vld [vmem:[#allocation2 + $0x1a0] sm:$0xff]
    %v93 = vld [vmem:[#allocation2 + $0x1a8] sm:$0xff]
    %v94 = vld [vmem:[#allocation2 + $0x1b0] sm:$0xff]
    %v95 = vld [vmem:[#allocation2 + $0x1b8] sm:$0xff]
    %v96 = vld [vmem:[#allocation2 + $0x1c0] sm:$0xff]
    %v97 = vld [vmem:[#allocation2 + $0x1c8] sm:$0xff]
    %v98 = vld [vmem:[#allocation2 + $0x1d0] sm:$0xff]
    %v99 = vld [vmem:[#allocation2 + $0x1d8] sm:$0xff]
    %v100 = vld [vmem:[#allocation2 + $0x1e0] sm:$0xff]
    %v101 = vld [vmem:[#allocation2 + $0x1e8] sm:$0xff]
    %v102 = vld [vmem:[#allocation2 + $0x1f0] sm:$0xff]
    %v103 = vld [vmem:[#allocation2 + $0x1f8] sm:$0xff]
    %104 = vmatprep.subr.mxu0 %v41
    %105 = vmatpush1.msra.mxu0 %v40
    %106 = vmatprep.subr.mxu0 %v43
    %107 = vmatpush1.msra.mxu0 %v42
    %108 = vmatprep.subr.mxu0 %v45
    %109 = vmatpush1.msra.mxu0 %v44
    %110 = vmatprep.subr.mxu0 %v47
    %111 = vmatpush1.msra.mxu0 %v46
    %112 = vmatprep.subr.mxu0 %v49
    %113 = vmatpush1.msra.mxu0 %v48
    %114 = vmatprep.subr.mxu0 %v51
    %115 = vmatpush1.msra.mxu0 %v50
    %116 = vmatprep.subr.mxu0 %v53
    %117 = vmatpush1.msra.mxu0 %v52
    %118 = vmatprep.subr.mxu0 %v55
    %119 = vmatpush1.msra.mxu0 %v54
    %120 = vmatprep.subr.mxu0 %v57
    %121 = vmatpush1.msra.mxu0 %v56
    %122 = vmatprep.subr.mxu0 %v59
    %123 = vmatpush1.msra.mxu0 %v58
    %124 = vmatprep.subr.mxu0 %v61
    %125 = vmatpush1.msra.mxu0 %v60
    %126 = vmatprep.subr.mxu0 %v63
    %127 = vmatpush1.msra.mxu0 %v62
    %128 = vmatprep.subr.mxu0 %v65
    %129 = vmatpush1.msra.mxu0 %v64
    %130 = vmatprep.subr.mxu0 %v67
    %131 = vmatpush1.msra.mxu0 %v66
    %132 = vmatprep.subr.mxu0 %v69
    %133 = vmatpush1.msra.mxu0 %v68
    %134 = vmatprep.subr.mxu0 %v71
    %135 = vmatpush1.msra.mxu0 %v70
    %136 = vmatprep.subr.mxu0 %v73
    %137 = vmatpush1.msra.mxu0 %v72
    %138 = vmatprep.subr.mxu0 %v75
    %139 = vmatpush1.msra.mxu0 %v74
    %140 = vmatprep.subr.mxu0 %v77
    %141 = vmatpush1.msra.mxu0 %v76
    %142 = vmatprep.subr.mxu0 %v79
    %143 = vmatpush1.msra.mxu0 %v78
    %144 = vmatprep.subr.mxu0 %v81
    %145 = vmatpush1.msra.mxu0 %v80
    %146 = vmatprep.subr.mxu0 %v83
    %147 = vmatpush1.msra.mxu0 %v82
    %148 = vmatprep.subr.mxu0 %v85
    %149 = vmatpush1.msra.mxu0 %v84
    %150 = vmatprep.subr.mxu0 %v87
    %151 = vmatpush1.msra.mxu0 %v86
    %152 = vmatprep.subr.mxu0 %v89
    %153 = vmatpush1.msra.mxu0 %v88
    %154 = vmatprep.subr.mxu0 %v91
    %155 = vmatpush1.msra.mxu0 %v90
    %156 = vmatprep.subr.mxu0 %v93
    %157 = vmatpush1.msra.mxu0 %v92
    %158 = vmatprep.subr.mxu0 %v95
    %159 = vmatpush1.msra.mxu0 %v94
    %160 = vmatprep.subr.mxu0 %v97
    %161 = vmatpush1.msra.mxu0 %v96
    %162 = vmatprep.subr.mxu0 %v99
    %163 = vmatpush1.msra.mxu0 %v98
    %164 = vmatprep.subr.mxu0 %v101
    %165 = vmatpush1.msra.mxu0 %v100
    %166 = vmatprep.subr.mxu0 %v103
    %167 = vmatpush1.msra.mxu0 %v102
    %168 = vmatprep.mubr.f32.mxu0 %v39
    %169 = vmatmul.mubr.f32.gmra.mrb[0].mxu0 %v38
    %v170 = vpop.f32.mrb[0].mxu0
    %v171 = vadd.f32 0.0, %v170
    %v172 = vpop.f32.mrb[0].mxu0
    %v173 = vadd.f32 0.0, %v172
    %174 = vdwg.mxu0
    %175 = vst [vmem:[#allocation7] sm:$0xff] %v171
    %176 = vst [vmem:[#allocation7 + $0x8] sm:$0xff] %v173
    // Predicated region
    $region18: #{tpu_custom_call.1} parent=1 // pred_check
      _
    $region19: #{tpu_custom_call.1} parent=1 // pred_check_branch
      %178 = sbr.rel (0) target = $region21
    $region20: #{tpu_custom_call.1} parent=1 // pred_region
      %s180 = ssub.s32 256, 256
      %181 = vsyncadd [#allocation4], %s180
      %s183 = sshll.u32 [#allocation7], 4
      %s184 = int_to_ptr.vmem [resolvable:$true] %s183
      %186 = dma.vmem_to_hbm [thread:$0]  %s184, 256, %s2, [#allocation4]
    $region21: #{tpu_custom_call.1} parent=1 // pred_fallthru
      _
    // Predicated region
    $region22: #{tpu_custom_call.1} parent=1 // pred_check
      _
    $region23: #{tpu_custom_call.1} parent=1 // pred_check_branch
      %188 = sbr.rel (0) target = $region25
    $region24: #{tpu_custom_call.1} parent=1 // pred_region
      %189 = dma.done [#allocation4], 256
    $region25: #{tpu_custom_call.1} parent=1 // pred_fallthru
      _
    %190 = vsyncpa [#allocation3], 1
    %191 = vsyncpa [#allocation6], 1
    %192 = vsyncpa [#allocation4], 1

</llo_original>
